<compile_context>
chip_gen: v6e
topology: v6e:2x2x1
jax: 0.10.0
libtpu: 0.0.40
codegen_flags: <defaults>
</compile_context>

<pallas_src>
import jax
import jax.numpy as jnp
from jax.experimental import pallas as pl
from jax.experimental.pallas import tpu as pltpu

D_IN, D_HID, D_OUT = 15, 50, 10


def _pool_decoder_kernel(xT_ref, w1_ref, b1_ref, w2_ref, b2_ref, oT_ref):
    # xT: [15, TB] f32                     w1: [50, 15] bf16 (resident)
    # b1: [50, 1]  f32 (resident)          w2: [10, 50] bf16 (resident)
    # b2: [10, 1]  f32 (resident)          oT: [10, TB] f32
    xT = xT_ref[...].astype(w1_ref.dtype)                       # VPU cast -> bf16
    h = jnp.dot(w1_ref[...], xT, preferred_element_type=jnp.float32)
    h = jnp.maximum(h + b1_ref[...], 0.0)                       # bias + ReLU in f32
    y = jnp.dot(w2_ref[...], h.astype(w2_ref.dtype),
                preferred_element_type=jnp.float32) + b2_ref[...]
    oT_ref[...] = y.astype(oT_ref.dtype)


def pool_decoder_forward_fm(xT, w1, b1, w2, b2, *, tb=4096):
    """Feature-major core: xT [15, B] f32 -> y^T [10, B] f32.

    Parameters use native torch shapes: w1 [50,15], b1 [50], w2 [10,50], b2 [10].
    """
    B = xT.shape[1]
    tb = max(128, (tb // 128) * 128)                 # keep tile a multiple of 128
    TB = max(128, min(tb, pl.cdiv(B, 128) * 128))    # lane-dim tile, no padding copies
    grid = (pl.cdiv(B, TB),)                         # ragged last block handled by Pallas

    w1b = w1.astype(jnp.bfloat16)                    # resident bf16 MXU operands
    w2b = w2.astype(jnp.bfloat16)
    b1c = b1.reshape(D_HID, 1).astype(jnp.float32)
    b2c = b2.reshape(D_OUT, 1).astype(jnp.float32)

    flops = 2 * B * (D_IN * D_HID + D_HID * D_OUT)
    bytes_accessed = (4 * B * (D_IN + D_OUT)
                      + 2 * (D_IN * D_HID + D_HID * D_OUT)
                      + 4 * (D_HID + D_OUT))

    return pl.pallas_call(
        _pool_decoder_kernel,
        out_shape=jax.ShapeDtypeStruct((D_OUT, B), jnp.float32),
        grid_spec=pltpu.PrefetchScalarGridSpec(
            num_scalar_prefetch=0,
            grid=grid,
            in_specs=[
                pl.BlockSpec((D_IN, TB), lambda i: (0, i)),      # x^T tile (pipelined)
                pl.BlockSpec((D_HID, D_IN), lambda i: (0, 0)),   # w1 (resident)
                pl.BlockSpec((D_HID, 1), lambda i: (0, 0)),      # b1 (resident)
                pl.BlockSpec((D_OUT, D_HID), lambda i: (0, 0)),  # w2 (resident)
                pl.BlockSpec((D_OUT, 1), lambda i: (0, 0)),      # b2 (resident)
            ],
            out_specs=pl.BlockSpec((D_OUT, TB), lambda i: (0, i)),
        ),
        compiler_params=pltpu.CompilerParams(
            dimension_semantics=("parallel",)),
        cost_estimate=pl.CostEstimate(
            flops=flops, transcendentals=0, bytes_accessed=bytes_accessed),
    )(xT, w1b, b1c, w2b, b2c)


def pool_decoder_forward(x, w1, b1, w2, b2, *, tb=4096):
    """Module contract: x [B, 15] f32 -> y [B, 10] f32.

    The two boundary transposes are plain XLA copies; call
    pool_decoder_forward_fm with [feat, batch] data (or fuse into the
    consumer) to avoid them.
    """
    yT = pool_decoder_forward_fm(x.T, w1, b1, w2, b2, tb=tb)
    return yT.T


def _init_params(key):
    """Deterministic init matching the PyTorch module's parameter shapes.

    nn.Linear(15, 50): weight [50, 15], bias [50]
    nn.Linear(50, 10): weight [10, 50], bias [10]
    torch default: U(-1/sqrt(fan_in), 1/sqrt(fan_in))
    """
    k1, k2, k3, k4 = jax.random.split(key, 4)
    bound1 = 1.0 / jnp.sqrt(float(D_IN))
    bound2 = 1.0 / jnp.sqrt(float(D_HID))
    w1 = jax.random.uniform(k1, (D_HID, D_IN), jnp.float32, -bound1, bound1)
    b1 = jax.random.uniform(k2, (D_HID,), jnp.float32, -bound1, bound1)
    w2 = jax.random.uniform(k3, (D_OUT, D_HID), jnp.float32, -bound2, bound2)
    b2 = jax.random.uniform(k4, (D_OUT,), jnp.float32, -bound2, bound2)
    return w1, b1, w2, b2


def _ref_f32(x, w1, b1, w2, b2):
    return jnp.maximum(x @ w1.T + b1, 0.0) @ w2.T + b2


def _ref_bf16_path(x, w1, b1, w2, b2):
    # Same math the kernel performs: bf16 MXU operands, f32 accumulation/bias.
    f32 = jnp.float32
    xb = x.astype(jnp.bfloat16).astype(f32)
    w1b = w1.astype(jnp.bfloat16).astype(f32)
    w2b = w2.astype(jnp.bfloat16).astype(f32)
    h = jnp.maximum(xb @ w1b.T + b1, 0.0)
    hb = h.astype(jnp.bfloat16).astype(f32)
    return hb @ w2b.T + b2


if __name__ == "__main__":
    key = jax.random.PRNGKey(0)
    k_x, k_p = jax.random.split(key)

    w1, b1, w2, b2 = _init_params(k_p)

    # Small batch (single ragged block, TB=128 > B).
    B = 8
    x = jax.random.normal(k_x, (B, D_IN), jnp.float32)
    y = jax.block_until_ready(pool_decoder_forward(x, w1, b1, w2, b2))
    assert y.shape == (B, D_OUT)
    assert jnp.allclose(y, _ref_bf16_path(x, w1, b1, w2, b2), atol=2e-3, rtol=2e-3)
    assert jnp.allclose(y, _ref_f32(x, w1, b1, w2, b2), atol=1e-1, rtol=1e-1)

    # Larger batch, not a multiple of the tile (4 grid steps, ragged last block).
    B2 = 2000
    x2 = jax.random.normal(k_x, (B2, D_IN), jnp.float32)
    y2 = jax.block_until_ready(pool_decoder_forward(x2, w1, b1, w2, b2, tb=512))
    assert y2.shape == (B2, D_OUT)
    assert jnp.allclose(y2, _ref_bf16_path(x2, w1, b1, w2, b2), atol=2e-3, rtol=2e-3)

    print("KERNEL_OK")
</pallas_src>

<mosaic_0001>
module attributes {stable_mosaic.version = 11 : i64} {
  func.func @_pool_decoder_kernel(%arg0: i32, %arg1: memref<15x128xf32, #tpu.memory_space<vmem>>, %arg2: memref<50x15xbf16, #tpu.memory_space<vmem>>, %arg3: memref<50x1xf32, #tpu.memory_space<vmem>>, %arg4: memref<10x50xbf16, #tpu.memory_space<vmem>>, %arg5: memref<10x1xf32, #tpu.memory_space<vmem>>, %arg6: memref<10x128xf32, #tpu.memory_space<vmem>>) attributes {dimension_semantics = [#tpu.dimension_semantics<parallel>], iteration_bounds = array<i64: 1>, scalar_prefetch = 0 : i64, scratch_operands = 0 : i64, tpu.core_type = #tpu.core_type<tc>, window_params = [{transform_indices = @transform_0, window_bounds = array<i64: 15, 128>}, {pipeline_mode = #tpu.pipeline_mode<synchronous>, transform_indices = @transform_1, window_bounds = array<i64: 50, 15>}, {pipeline_mode = #tpu.pipeline_mode<synchronous>, transform_indices = @transform_2, window_bounds = array<i64: 50, 1>}, {pipeline_mode = #tpu.pipeline_mode<synchronous>, transform_indices = @transform_3, window_bounds = array<i64: 10, 50>}, {pipeline_mode = #tpu.pipeline_mode<synchronous>, transform_indices = @transform_4, window_bounds = array<i64: 10, 1>}, {transform_indices = @transform_5, window_bounds = array<i64: 10, 128>}]} {
    %c0 = arith.constant 0 : index
    %c0_0 = arith.constant 0 : index
    %0 = vector.load %arg1[%c0, %c0_0] : memref<15x128xf32, #tpu.memory_space<vmem>>, vector<15x128xf32>
    %1 = arith.truncf %0 : vector<15x128xf32> to vector<15x128xbf16>
    %c0_1 = arith.constant 0 : index
    %c0_2 = arith.constant 0 : index
    %2 = vector.load %arg2[%c0_1, %c0_2] : memref<50x15xbf16, #tpu.memory_space<vmem>>, vector<50x15xbf16>
    %cst = arith.constant dense<0.000000e+00> : vector<50x128xf32>
    %3 = tpu.matmul %2, %1, %cst {dimension_numbers = #tpu.dot_dimension_numbers<[1], [0], [0], [1], [0, 0, 1, 1], [], []>} : vector<50x15xbf16>, vector<15x128xbf16>, vector<50x128xf32> -> vector<50x128xf32>
    %c0_3 = arith.constant 0 : index
    %c0_4 = arith.constant 0 : index
    %4 = vector.load %arg3[%c0_3, %c0_4] : memref<50x1xf32, #tpu.memory_space<vmem>>, vector<50x1xf32>
    %5 = vector.broadcast %4 : vector<50x1xf32> to vector<50x128xf32>
    %6 = arith.addf %3, %5 : vector<50x128xf32>
    %cst_5 = arith.constant 0.000000e+00 : f32
    %7 = vector.broadcast %cst_5 : f32 to vector<50x128xf32>
    %8 = arith.maximumf %6, %7 : vector<50x128xf32>
    %c0_6 = arith.constant 0 : index
    %c0_7 = arith.constant 0 : index
    %9 = vector.load %arg4[%c0_6, %c0_7] : memref<10x50xbf16, #tpu.memory_space<vmem>>, vector<10x50xbf16>
    %10 = arith.truncf %8 : vector<50x128xf32> to vector<50x128xbf16>
    %cst_8 = arith.constant dense<0.000000e+00> : vector<10x128xf32>
    %11 = tpu.matmul %9, %10, %cst_8 {dimension_numbers = #tpu.dot_dimension_numbers<[1], [0], [0], [1], [0, 0, 1, 1], [], []>} : vector<10x50xbf16>, vector<50x128xbf16>, vector<10x128xf32> -> vector<10x128xf32>
    %c0_9 = arith.constant 0 : index
    %c0_10 = arith.constant 0 : index
    %12 = vector.load %arg5[%c0_9, %c0_10] : memref<10x1xf32, #tpu.memory_space<vmem>>, vector<10x1xf32>
    %13 = vector.broadcast %12 : vector<10x1xf32> to vector<10x128xf32>
    %14 = arith.addf %11, %13 : vector<10x128xf32>
    %c0_11 = arith.constant 0 : index
    %c0_12 = arith.constant 0 : index
    %15 = vector.load %arg6[%c0_11, %c0_12] : memref<10x128xf32, #tpu.memory_space<vmem>>, vector<10x128xf32>
    tpu.vector_store %arg6[%c0_11, %c0_12], %14 {strides = array<i32>} : memref<10x128xf32, #tpu.memory_space<vmem>>, vector<10x128xf32>,
    return
  }
  func.func @transform_0(%arg0: i32) -> (i32, i32) {
    %c0_i32 = arith.constant 0 : i32
    %c0_i32_0 = arith.constant 0 : i32
    return %c0_i32, %arg0 : i32, i32
  }
  func.func @transform_1(%arg0: i32) -> (i32, i32) {
    %c0_i32 = arith.constant 0 : i32
    %c0_i32_0 = arith.constant 0 : i32
    %c0_i32_1 = arith.constant 0 : i32
    return %c0_i32, %c0_i32_0 : i32, i32
  }
  func.func @transform_2(%arg0: i32) -> (i32, i32) {
    %c0_i32 = arith.constant 0 : i32
    %c0_i32_0 = arith.constant 0 : i32
    %c0_i32_1 = arith.constant 0 : i32
    return %c0_i32, %c0_i32_0 : i32, i32
  }
  func.func @transform_3(%arg0: i32) -> (i32, i32) {
    %c0_i32 = arith.constant 0 : i32
    %c0_i32_0 = arith.constant 0 : i32
    %c0_i32_1 = arith.constant 0 : i32
    return %c0_i32, %c0_i32_0 : i32, i32
  }
  func.func @transform_4(%arg0: i32) -> (i32, i32) {
    %c0_i32 = arith.constant 0 : i32
    %c0_i32_0 = arith.constant 0 : i32
    %c0_i32_1 = arith.constant 0 : i32
    return %c0_i32, %c0_i32_0 : i32, i32
  }
  func.func @transform_5(%arg0: i32) -> (i32, i32) {
    %c0_i32 = arith.constant 0 : i32
    %c0_i32_0 = arith.constant 0 : i32
    return %c0_i32, %arg0 : i32, i32
  }
}

</mosaic_0001>

<llo_original>
// kernel: tpu_custom_call.1
$region0: #{tpu_custom_call.1}
  #allocation0 [shape = 'u32[]', space=smem, size = 0x4, offset = 0x4, fixed_abs, tag = 'smem constant byte address 0x4 - core index']
  #allocation1 [shape = 'u32[144,128]{1,0:T(1,128)}', space=vmem, size = 0x12000, scoped, tag = 'internal scratch']
  %s0 = inlined_call_operand.vmem [shape: f32[15,8], index: 0, kind: input, shape index: {}]
  %s1 = inlined_call_operand.vmem [shape: bf16[50,15], index: 1, kind: input, shape index: {}]
  %s2 = inlined_call_operand.vmem [shape: f32[50,1], index: 2, kind: input, shape index: {}]
  %s3 = inlined_call_operand.vmem [shape: bf16[10,50], index: 3, kind: input, shape index: {}]
  %s4 = inlined_call_operand.vmem [shape: f32[10,1], index: 4, kind: input, shape index: {}]
  %s5 = inlined_call_operand.vmem [shape: f32[10,8], index: 5, kind: output, shape index: {}]
  %s6 = sld [smem:[#allocation0]]
  $region30: #{tpu_custom_call.1} parent=0
    _
  %s8 = ssub.s32 1, %s6
  %s9 = scalar_select 0, %s8, %s6
  // Predicated region
  $region2: #{tpu_custom_call.1} parent=0 // pred_check
    _
  $region3: #{tpu_custom_call.1} parent=0 // pred_check_branch
    %11 = sbr.rel (0) target = $region5
  $region4: #{tpu_custom_call.1} parent=0 // pred_region
    _
  $region5: #{tpu_custom_call.1} parent=0 // pred_fallthru
    _
  // Predicated region
  $region6: #{tpu_custom_call.1} parent=0 // pred_check
    _
  $region7: #{tpu_custom_call.1} parent=0 // pred_check_branch
    %13 = sbr.rel (0) target = $region9
  $region8: #{tpu_custom_call.1} parent=0 // pred_region
    _
  $region9: #{tpu_custom_call.1} parent=0 // pred_fallthru
    _
  // Predicated region
  $region10: #{tpu_custom_call.1} parent=0 // pred_check
    _
  $region11: #{tpu_custom_call.1} parent=0 // pred_check_branch
    %15 = sbr.rel (0) target = $region13
  $region12: #{tpu_custom_call.1} parent=0 // pred_region
    _
  $region13: #{tpu_custom_call.1} parent=0 // pred_fallthru
    _
  // Predicated region
  $region14: #{tpu_custom_call.1} parent=0 // pred_check
    _
  $region15: #{tpu_custom_call.1} parent=0 // pred_check_branch
    %17 = sbr.rel (0) target = $region17
  $region16: #{tpu_custom_call.1} parent=0 // pred_region
    _
  $region17: #{tpu_custom_call.1} parent=0 // pred_fallthru
    _
  // Predicated region
  $region18: #{tpu_custom_call.1} parent=0 // pred_check
    _
  $region19: #{tpu_custom_call.1} parent=0 // pred_check_branch
    %19 = sbr.rel (0) target = $region21
  $region20: #{tpu_custom_call.1} parent=0 // pred_region
    _
  $region21: #{tpu_custom_call.1} parent=0 // pred_fallthru
    _
  %v21 = vld [vmem:[%s0] sm:$0xff]
  %v22 = vld [vmem:[%s0 + $0x8] sm:$0x7f]
  %v23 = vpack.c.bf16 %v22, %v21
  %v24 = vld [vmem:[%s1] sm:$0xf]
  %v25 = vld [vmem:[%s1 + $0x4] sm:$0xf]
  %v26 = vld [vmem:[%s1 + $0x8] sm:$0xf]
  %v27 = vld [vmem:[%s1 + $0xc] sm:$0xf]
  %v28 = vld [vmem:[%s1 + $0x10] sm:$0xf]
  %v29 = vld [vmem:[%s1 + $0x14] sm:$0xf]
  %v30 = vld [vmem:[%s1 + $0x18] sm:$0x1]
  %v31 = vld [vmem:[%s2] sm:$0xff]
  %v32 = vld [vmem:[%s2 + $0x8] sm:$0xff]
  %v33 = vld [vmem:[%s2 + $0x10] sm:$0xff]
  %v34 = vld [vmem:[%s2 + $0x18] sm:$0xff]
  %v35 = vld [vmem:[%s2 + $0x20] sm:$0xff]
  %v36 = vld [vmem:[%s2 + $0x28] sm:$0xff]
  %v37 = vld [vmem:[%s2 + $0x30] sm:$0x3]
  %39 = vset.pattern.permute.xlu0 0
  %40 = vperm.xlu0 %39, %v31
  %v41 = vpop.permute.xlu0 %40
  %44 = vset.pattern.permute.xlu0 0
  %45 = vperm.xlu0 %44, %v32
  %v46 = vpop.permute.xlu0 %45
  %49 = vset.pattern.permute.xlu0 0
  %50 = vperm.xlu0 %49, %v33
  %v51 = vpop.permute.xlu0 %50
  %54 = vset.pattern.permute.xlu0 0
  %55 = vperm.xlu0 %54, %v34
  %v56 = vpop.permute.xlu0 %55
  %59 = vset.pattern.permute.xlu0 0
  %60 = vperm.xlu0 %59, %v35
  %v61 = vpop.permute.xlu0 %60
  %64 = vset.pattern.permute.xlu0 0
  %65 = vperm.xlu0 %64, %v36
  %v66 = vpop.permute.xlu0 %65
  %69 = vset.pattern.permute.xlu0 0
  %70 = vperm.xlu0 %69, %v37
  %v71 = vpop.permute.xlu0 %70
  %v80 = vunpack.c.l.b16 %v24
  %v81 = vunpack.c.l.b16 %v25
  %v82 = vunpack.c.l.b16 %v26
  %v83 = vunpack.c.l.b16 %v27
  %v84 = vunpack.c.l.b16 %v28
  %v85 = vunpack.c.l.b16 %v29
  %v86 = vunpack.c.l.b16 %v30
  %v87 = vpack.c.b16 %v81, %v80
  %v88 = vpack.c.b16 %v83, %v82
  %v89 = vpack.c.b16 %v85, %v84
  %v90 = vpack.c.b16 %v86, %v86
  %vm91 = vcmask 121856
  %v93 = vsel %vm91, %v87, 0
  %v96 = vsel %vm91, %v88, 0
  %v99 = vsel %vm91, %v89, 0
  %v102 = vsel %vm91, %v90, 0
  %vm104 = vcmask 1046528
  %vm105 = vcmask 1047552
  %v106 = vsel %vm104, 4294967295, 65535
  %v107 = vsel %vm105, %v106, 0
  %v109 = vand.u32 %v23, %v107
  %111 = vmatprep.subr.bf16.mxu0 0
  %112 = vmatpush1.bf16.msra.mxu0 0
  %113 = vmatprep.subr.bf16.mxu0 0
  %114 = vmatpush1.bf16.msra.mxu0 0
  %115 = vmatprep.subr.bf16.mxu0 0
  %116 = vmatpush1.bf16.msra.mxu0 0
  %117 = vmatprep.subr.bf16.mxu0 0
  %118 = vmatpush1.bf16.msra.mxu0 0
  %119 = vmatprep.subr.bf16.mxu0 0
  %120 = vmatpush1.bf16.msra.mxu0 0
  %121 = vmatprep.subr.bf16.mxu0 0
  %122 = vmatpush1.bf16.msra.mxu0 0
  %123 = vmatprep.subr.bf16.mxu0 0
  %124 = vmatpush1.bf16.msra.mxu0 0
  %125 = vmatprep.subr.bf16.mxu0 0
  %126 = vmatpush1.bf16.msra.mxu0 %v109
  %127 = vmatprep.subr.bf16.mxu0 0
  %128 = vmatpush2.bf16.msra.mxu0 0
  %129 = vmatprep.subr.bf16.mxu0 0
  %130 = vmatpush2.bf16.msra.mxu0 0
  %131 = vmatprep.subr.bf16.mxu0 0
  %132 = vmatpush2.bf16.msra.mxu0 0
  %133 = vmatprep.subr.bf16.mxu0 0
  %134 = vmatpush2.bf16.msra.mxu0 0
  %135 = vmatprep.subr.bf16.mxu0 0
  %136 = vmatpush2.bf16.msra.mxu0 0
  %137 = vmatprep.subr.bf16.mxu0 0
  %138 = vmatpush2.bf16.msra.mxu0 0
  %139 = vmatprep.subr.bf16.mxu0 0
  %140 = vmatpush2.bf16.msra.mxu0 0
  %141 = vmatprep.subr.bf16.mxu0 0
  %142 = vmatpush2.bf16.msra.mxu0 0
  %143 = vmatprep.mubr.bf16.mxu0 0
  %144 = vmatmul.mubr.bf16.gmra.mxu0 %v93
  %v145 = vpop.f32.mrf.mxu0
  %v146 = vadd.f32 %v41, %v145
  %v147 = vpop.f32.mrf.mxu0
  %v148 = vpop.f32.mrf.mxu0
  %v149 = vadd.f32 %v46, %v148
  %v150 = vpop.f32.mrf.mxu0
  %151 = vmatprep.mubr.bf16.mxu0 0
  %152 = vmatmul.mubr.bf16.gmra.mxu0 %v96
  %v153 = vpop.f32.mrf.mxu0
  %v154 = vadd.f32 %v51, %v153
  %v155 = vpop.f32.mrf.mxu0
  %v156 = vpop.f32.mrf.mxu0
  %v157 = vadd.f32 %v56, %v156
  %v158 = vpop.f32.mrf.mxu0
  %159 = vmatprep.mubr.bf16.mxu0 0
  %160 = vmatmul.mubr.bf16.gmra.mxu0 %v99
  %v161 = vpop.f32.mrf.mxu0
  %v162 = vadd.f32 %v61, %v161
  %v163 = vpop.f32.mrf.mxu0
  %v164 = vpop.f32.mrf.mxu0
  %v165 = vadd.f32 %v66, %v164
  %v166 = vpop.f32.mrf.mxu0
  %167 = vmatprep.mubr.bf16.mxu0 0
  %168 = vmatmul.mubr.bf16.gmra.mxu0 %v102
  %v169 = vpop.f32.mrf.mxu0
  %v170 = vadd.f32 %v71, %v169
  %v171 = vpop.f32.mrf.mxu0
  %v172 = vpop.f32.mrf.mxu0
  %v173 = vpop.f32.mrf.mxu0
  %174 = vdwg.mxu0
  %v175 = vmax.f32 %v146, 0.0
  %v176 = vmax.f32 %v149, 0.0
  %v177 = vmax.f32 %v154, 0.0
  %v178 = vmax.f32 %v157, 0.0
  %v179 = vmax.f32 %v162, 0.0
  %v180 = vmax.f32 %v165, 0.0
  %v181 = vmax.f32 %v170, 0.0
  %v182 = vld [vmem:[%s3] sm:$0xf]
  %v183 = vld [vmem:[%s3 + $0x4] sm:$0x1]
  %v184 = vpack.c.bf16 %v176, %v175
  %v185 = vpack.c.bf16 %v178, %v177
  %v186 = vpack.c.bf16 %v180, %v179
  %v187 = vpack.c.bf16 %v181, %v181
  %v188 = vld [vmem:[%s4] sm:$0xff]
  %v189 = vld [vmem:[%s4 + $0x8] sm:$0x3]
  %191 = vset.pattern.permute.xlu0 0
  %192 = vperm.xlu0 %191, %v188
  %v193 = vpop.permute.xlu0 %192
  %196 = vset.pattern.permute.xlu0 0
  %197 = vperm.xlu0 %196, %v189
  %v198 = vpop.permute.xlu0 %197
  %v202 = vunpack.c.l.b16 %v182
  %v203 = vunpack.c.l.b16 %v183
  %v204 = vpack.c.b16 %v203, %v202
  %vm205 = vcmask 408576
  %v207 = vsel %vm205, %v204, 0
  %vm209 = vcmask 1040384
  %v211 = vsel %vm209, %v187, 0
  %213 = vmatprep.subr.bf16.mxu0 0
  %214 = vmatpush1.bf16.msra.mxu0 0
  %215 = vmatprep.subr.bf16.mxu0 0
  %216 = vmatpush1.bf16.msra.mxu0 0
  %217 = vmatprep.subr.bf16.mxu0 0
  %218 = vmatpush1.bf16.msra.mxu0 0
  %219 = vmatprep.subr.bf16.mxu0 0
  %220 = vmatpush1.bf16.msra.mxu0 0
  %221 = vmatprep.subr.bf16.mxu0 0
  %222 = vmatpush1.bf16.msra.mxu0 %v211
  %223 = vmatprep.subr.bf16.mxu0 0
  %224 = vmatpush1.bf16.msra.mxu0 %v186
  %225 = vmatprep.subr.bf16.mxu0 0
  %226 = vmatpush1.bf16.msra.mxu0 %v185
  %227 = vmatprep.subr.bf16.mxu0 0
  %228 = vmatpush1.bf16.msra.mxu0 %v184
  %229 = vmatprep.subr.bf16.mxu0 0
  %230 = vmatpush2.bf16.msra.mxu0 0
  %231 = vmatprep.subr.bf16.mxu0 0
  %232 = vmatpush2.bf16.msra.mxu0 0
  %233 = vmatprep.subr.bf16.mxu0 0
  %234 = vmatpush2.bf16.msra.mxu0 0
  %235 = vmatprep.subr.bf16.mxu0 0
  %236 = vmatpush2.bf16.msra.mxu0 0
  %237 = vmatprep.subr.bf16.mxu0 0
  %238 = vmatpush2.bf16.msra.mxu0 0
  %239 = vmatprep.subr.bf16.mxu0 0
  %240 = vmatpush2.bf16.msra.mxu0 0
  %241 = vmatprep.subr.bf16.mxu0 0
  %242 = vmatpush2.bf16.msra.mxu0 0
  %243 = vmatprep.subr.bf16.mxu0 0
  %244 = vmatpush2.bf16.msra.mxu0 0
  %245 = vmatprep.mubr.bf16.mxu0 0
  %246 = vmatmul.mubr.bf16.gmra.mxu0 %v207
  %v247 = vpop.f32.mrf.mxu0
  %v248 = vadd.f32 %v193, %v247
  %v249 = vpop.f32.mrf.mxu0
  %v250 = vpop.f32.mrf.mxu0
  %v251 = vadd.f32 %v198, %v250
  %v252 = vpop.f32.mrf.mxu0
  %253 = vdwg.mxu0
  %254 = vst [vmem:[%s5] sm:$0xff] %v248
  %255 = vst [vmem:[%s5 + $0x8] sm:$0x3] %v251
  // Predicated region
  $region22: #{tpu_custom_call.1} parent=0 // pred_check
    _
  $region23: #{tpu_custom_call.1} parent=0 // pred_check_branch
    %257 = sbr.rel (0) target = $region25
  $region24: #{tpu_custom_call.1} parent=0 // pred_region
    _
  $region25: #{tpu_custom_call.1} parent=0 // pred_fallthru
    _
  // Predicated region
  $region26: #{tpu_custom_call.1} parent=0 // pred_check
    _
  $region27: #{tpu_custom_call.1} parent=0 // pred_check_branch
    %259 = sbr.rel (0) target = $region29
  $region28: #{tpu_custom_call.1} parent=0 // pred_region
    _
  $region29: #{tpu_custom_call.1} parent=0 // pred_fallthru
    _

</llo_original>
